<compile_context>
chip_gen: v7x
topology: tpu7x:2x2x1
jax: 0.10.0
libtpu: 0.0.40
codegen_flags: <defaults>
</compile_context>

<pallas_src>
import functools

import jax
import jax.numpy as jnp
from jax import lax
from jax.experimental import pallas as pl
from jax.experimental.pallas import tpu as pltpu

_LANE = 128
# (8192, 128) f32 = 4 MiB per input block; 2 inputs x 2 pipeline buffers (32 MiB)
# + the 4 MiB resident f32 accumulator ~= 36 MiB.  We raise the scoped VMEM
# limit explicitly to 48 MiB, which fits v5e/v6e (128 MiB physical) and v7x
# (64 MiB physical per TC) with headroom.
_MAX_ROW_TILE = 8192
_VMEM_LIMIT_BYTES = 48 * 1024 * 1024


def _round_up(x, m):
    return ((x + m - 1) // m) * m


def _tensorcores_per_chip():
    # The 2-way "parallel" core split only pays off on v7x (2 TensorCores per
    # chip, each with its own HBM bandwidth).  On v5e/v6e it is a sequential
    # loop that just adds writeback + duplicate-block DMA, so keep ncore = 1.
    try:
        kind = jax.devices()[0].device_kind.lower()
    except Exception:
        return 1
    return 2 if ("v7" in kind or "7x" in kind) else 1


def _abs_diff_sum_kernel(ts_ref, is_ref, out_ref, acc_ref, *,
                         rows, row_tile, full_blocks, inner_blocks):
    """Accumulate |input_speech - target_speech| into a VMEM-resident scratch.

    Hot path (all fully in-range blocks): acc += abs(a - b), no mask work.
    Only the last (partial) block and the rare clamped duplicate block take the
    masked branch.  At the end of the sweep the accumulator is reduced over
    sublane groups into a tiny (8, 128) lane-dense output block.
    """
    c = pl.program_id(0)   # TensorCore split ("parallel"; only >1 on v7x)
    i = pl.program_id(1)   # sequential row-block sweep ("arbitrary")
    n_i = pl.num_programs(1)

    @pl.when(i == 0)
    def _():
        acc_ref[...] = jnp.zeros_like(acc_ref)

    global_block = c * inner_blocks + i   # unclamped logical block index

    @pl.when(global_block < full_blocks)
    def _():
        # Fully in-range block: pure VPU sub/abs/add, no iota/compare/select.
        acc_ref[...] += jnp.abs(
            is_ref[...].astype(jnp.float32) - ts_ref[...].astype(jnp.float32))

    @pl.when(global_block >= full_blocks)
    def _():
        # Partial tail block (or a clamped duplicate block): mask rows past the
        # true row count so Pallas DMA padding / duplicate data contributes 0.
        row_idx = global_block * row_tile + lax.broadcasted_iota(
            jnp.int32, (row_tile, _LANE), 0)
        valid = row_idx < rows
        diff = jnp.abs(
            is_ref[...].astype(jnp.float32) - ts_ref[...].astype(jnp.float32))
        acc_ref[...] += jnp.where(valid, diff, 0.0)

    @pl.when(i == n_i - 1)
    def _():
        # One-time sublane-group reduce (row_tile,128) -> (8,128); only a few
        # KB go back to HBM instead of the full per-core partials tile.
        acc = acc_ref[...]
        out_ref[...] = acc.reshape(row_tile // 8, 8, _LANE).sum(axis=0)


def _split_main_tail(x):
    """Flatten to a lane-aligned (rows, 128) prefix + a <128-element tail.

    No padded copy is materialized; the tail is handled by XLA."""
    flat = x.reshape(-1)
    n = flat.size
    rows = n // _LANE
    main = flat[: rows * _LANE].reshape(rows, _LANE)
    tail = flat[rows * _LANE:]
    return main, tail, rows


def _run_kernel(ts2d, is2d, rows):
    row_tile = min(_MAX_ROW_TILE, _round_up(rows, 8))
    nblk = pl.cdiv(rows, row_tile)
    ncore = 2 if (_tensorcores_per_chip() == 2 and nblk >= 2) else 1
    inner = pl.cdiv(nblk, ncore)
    if ncore == 2:
        # Best effort: re-pick row_tile so both cores get the same number of
        # blocks and no clamped duplicate block is DMA'd.  The in-kernel mask
        # remains as a correctness safety net for any leftover imbalance.
        row_tile = min(_MAX_ROW_TILE, _round_up(pl.cdiv(rows, ncore * inner), 8))
        nblk = pl.cdiv(rows, row_tile)
        inner = pl.cdiv(nblk, ncore)
    full_blocks = rows // row_tile   # blocks entirely within the real rows

    def in_map(c, i):
        # Clamp keeps any leftover block in-bounds; it is fully masked in the
        # kernel via the unclamped global block index.
        return (jnp.minimum(c * inner + i, nblk - 1), 0)

    kernel = functools.partial(
        _abs_diff_sum_kernel, rows=rows, row_tile=row_tile,
        full_blocks=full_blocks, inner_blocks=inner)

    itemsize = jnp.dtype(ts2d.dtype).itemsize
    return pl.pallas_call(
        kernel,
        out_shape=jax.ShapeDtypeStruct((ncore * 8, _LANE), jnp.float32),
        grid_spec=pltpu.PrefetchScalarGridSpec(
            num_scalar_prefetch=0,
            grid=(ncore, inner),
            in_specs=[
                pl.BlockSpec((row_tile, _LANE), in_map),
                pl.BlockSpec((row_tile, _LANE), in_map),
            ],
            out_specs=pl.BlockSpec((8, _LANE), lambda c, i: (c, 0)),
            scratch_shapes=[pltpu.VMEM((row_tile, _LANE), jnp.float32)],
        ),
        compiler_params=pltpu.CompilerParams(
            dimension_semantics=("parallel", "arbitrary"),
            vmem_limit_bytes=_VMEM_LIMIT_BYTES,
        ),
        cost_estimate=pl.CostEstimate(
            flops=3 * rows * _LANE,
            transcendentals=0,
            bytes_accessed=2 * rows * _LANE * itemsize + ncore * 8 * _LANE * 4,
        ),
    )(ts2d, is2d)


@jax.jit
def my_loss(target_speech, target_noise, input_speech):
    # target_noise cancels exactly (see header comment); accepted to keep the
    # module signature but never read by the kernel.
    del target_noise

    ts_main, ts_tail, rows = _split_main_tail(target_speech)
    is_main, is_tail, rows2 = _split_main_tail(input_speech)
    assert rows == rows2, "target_speech and input_speech must have the same numel"

    n = target_speech.size

    # <128-element tail summed by XLA (at most 127 elements; zero cost).
    tail_sum = jnp.sum(jnp.abs(is_tail.astype(jnp.float32)
                               - ts_tail.astype(jnp.float32)))

    if rows == 0:
        total = tail_sum
    else:
        partials = _run_kernel(ts_main, is_main, rows)
        # Tiny final cross-lane reduction (<= 2 * 8 * 128 f32) left to XLA.
        total = jnp.sum(partials) + tail_sum

    return 2.0 * total / jnp.float32(n)


def _reference(ts, tn, isp):
    # Mirrors the PyTorch forward exactly.
    inoise = ts + tn - isp
    return jnp.mean(jnp.abs(isp - ts)) + jnp.mean(jnp.abs(inoise - tn))


if __name__ == "__main__":
    key = jax.random.PRNGKey(0)
    keys = jax.random.split(key, 9)

    # Check 1: lane-aligned small "speech" tensors (2*4*16*16 = 2048 elements).
    shape = (2, 4, 16, 16)
    ts = jax.random.normal(keys[0], shape, dtype=jnp.float32)
    tn = jax.random.normal(keys[1], shape, dtype=jnp.float32)
    isp = jax.random.normal(keys[2], shape, dtype=jnp.float32)
    loss = my_loss(ts, tn, isp)
    jax.block_until_ready(loss)
    ref = _reference(ts, tn, isp)
    assert jnp.allclose(loss, ref, rtol=1e-5, atol=1e-5), (loss, ref)

    # Check 2: non-128-aligned numel (5*800 = 4000) exercises the masked tail
    # block + XLA tail-sum path (no padded copies).
    shape2 = (5, 800)
    ts2 = jax.random.normal(keys[3], shape2, dtype=jnp.float32)
    tn2 = jax.random.normal(keys[4], shape2, dtype=jnp.float32)
    isp2 = jax.random.normal(keys[5], shape2, dtype=jnp.float32)
    loss2 = my_loss(ts2, tn2, isp2)
    jax.block_until_ready(loss2)
    ref2 = _reference(ts2, tn2, isp2)
    assert jnp.allclose(loss2, ref2, rtol=1e-5, atol=1e-5), (loss2, ref2)

    # Check 3: fewer than 128 elements (3*40 = 120) -> pure-XLA fallback path.
    shape3 = (3, 40)
    ts3 = jax.random.normal(keys[6], shape3, dtype=jnp.float32)
    tn3 = jax.random.normal(keys[7], shape3, dtype=jnp.float32)
    isp3 = jax.random.normal(keys[8], shape3, dtype=jnp.float32)
    loss3 = my_loss(ts3, tn3, isp3)
    jax.block_until_ready(loss3)
    ref3 = _reference(ts3, tn3, isp3)
    assert jnp.allclose(loss3, ref3, rtol=1e-5, atol=1e-5), (loss3, ref3)

    print("KERNEL_OK")
</pallas_src>

<mosaic_0001>
module attributes {stable_mosaic.version = 11 : i64} {
  func.func @_abs_diff_sum_kernel(%arg0: i32, %arg1: i32, %arg2: memref<16x128xf32, #tpu.memory_space<vmem>>, %arg3: memref<16x128xf32, #tpu.memory_space<vmem>>, %arg4: memref<8x128xf32, #tpu.memory_space<vmem>>, %arg5: memref<16x128xf32, #tpu.memory_space<vmem>>) attributes {dimension_semantics = [#tpu.dimension_semantics<parallel>, #tpu.dimension_semantics<arbitrary>], iteration_bounds = array<i64: 1, 1>, scalar_prefetch = 0 : i64, scratch_operands = 1 : i64, tpu.core_type = #tpu.core_type<tc>, window_params = [{transform_indices = @transform_0, window_bounds = array<i64: 16, 128>}, {transform_indices = @transform_1, window_bounds = array<i64: 16, 128>}, {transform_indices = @transform_2, window_bounds = array<i64: 8, 128>}]} {
    %c0_i32 = arith.constant 0 : i32
    %0 = arith.cmpi eq, %arg1, %c0_i32 : i32
    %1 = arith.extui %0 : i1 to i32
    %c0_i32_0 = arith.constant 0 : i32
    %2 = arith.cmpi ne, %1, %c0_i32_0 : i32
    scf.if %2 {
      %cst = arith.constant 0.000000e+00 : f32
      %14 = vector.broadcast %cst : f32 to vector<16x128xf32>
      %c0 = arith.constant 0 : index
      %c0_7 = arith.constant 0 : index
      %15 = vector.load %arg5[%c0, %c0_7] : memref<16x128xf32, #tpu.memory_space<vmem>>, vector<16x128xf32>
      tpu.vector_store %arg5[%c0, %c0_7], %14 {strides = array<i32>} : memref<16x128xf32, #tpu.memory_space<vmem>>, vector<16x128xf32>,
    } else {
    }
    %c1_i32 = arith.constant 1 : i32
    %3 = arith.muli %arg0, %c1_i32 : i32
    %4 = arith.addi %3, %arg1 : i32
    %c1_i32_1 = arith.constant 1 : i32
    %5 = arith.cmpi slt, %4, %c1_i32_1 : i32
    %6 = arith.extui %5 : i1 to i32
    %c0_i32_2 = arith.constant 0 : i32
    %7 = arith.cmpi ne, %6, %c0_i32_2 : i32
    scf.if %7 {
      %c0 = arith.constant 0 : index
      %c0_7 = arith.constant 0 : index
      %14 = vector.load %arg5[%c0, %c0_7] : memref<16x128xf32, #tpu.memory_space<vmem>>, vector<16x128xf32>
      %c0_8 = arith.constant 0 : index
      %c0_9 = arith.constant 0 : index
      %15 = vector.load %arg3[%c0_8, %c0_9] : memref<16x128xf32, #tpu.memory_space<vmem>>, vector<16x128xf32>
      %c0_10 = arith.constant 0 : index
      %c0_11 = arith.constant 0 : index
      %16 = vector.load %arg2[%c0_10, %c0_11] : memref<16x128xf32, #tpu.memory_space<vmem>>, vector<16x128xf32>
      %17 = arith.subf %15, %16 : vector<16x128xf32>
      %18 = math.absf %17 : vector<16x128xf32>
      %19 = arith.addf %14, %18 : vector<16x128xf32>
      %c0_12 = arith.constant 0 : index
      %c0_13 = arith.constant 0 : index
      %20 = vector.load %arg5[%c0_12, %c0_13] : memref<16x128xf32, #tpu.memory_space<vmem>>, vector<16x128xf32>
      tpu.vector_store %arg5[%c0_12, %c0_13], %19 {strides = array<i32>} : memref<16x128xf32, #tpu.memory_space<vmem>>, vector<16x128xf32>,
    } else {
    }
    %c1_i32_3 = arith.constant 1 : i32
    %8 = arith.cmpi sge, %4, %c1_i32_3 : i32
    %9 = arith.extui %8 : i1 to i32
    %c0_i32_4 = arith.constant 0 : i32
    %10 = arith.cmpi ne, %9, %c0_i32_4 : i32
    scf.if %10 {
      %c16_i32 = arith.constant 16 : i32
      %14 = arith.muli %4, %c16_i32 : i32
      %15 = tpu.iota {dimensions = array<i32: 0>} : vector<16x128xi32>
      %16 = vector.broadcast %14 : i32 to vector<16x128xi32>
      %17 = arith.addi %16, %15 : vector<16x128xi32>
      %c16_i32_7 = arith.constant 16 : i32
      %18 = vector.broadcast %c16_i32_7 : i32 to vector<16x128xi32>
      %19 = arith.cmpi slt, %17, %18 : vector<16x128xi32>
      %c0 = arith.constant 0 : index
      %c0_8 = arith.constant 0 : index
      %20 = vector.load %arg3[%c0, %c0_8] : memref<16x128xf32, #tpu.memory_space<vmem>>, vector<16x128xf32>
      %c0_9 = arith.constant 0 : index
      %c0_10 = arith.constant 0 : index
      %21 = vector.load %arg2[%c0_9, %c0_10] : memref<16x128xf32, #tpu.memory_space<vmem>>, vector<16x128xf32>
      %22 = arith.subf %20, %21 : vector<16x128xf32>
      %23 = math.absf %22 : vector<16x128xf32>
      %c0_11 = arith.constant 0 : index
      %c0_12 = arith.constant 0 : index
      %24 = vector.load %arg5[%c0_11, %c0_12] : memref<16x128xf32, #tpu.memory_space<vmem>>, vector<16x128xf32>
      %cst = arith.constant 0.000000e+00 : f32
      %25 = vector.broadcast %cst : f32 to vector<16x128xf32>
      %26 = arith.select %19, %23, %25 : vector<16x128xi1>, vector<16x128xf32>
      %27 = arith.addf %24, %26 : vector<16x128xf32>
      %c0_13 = arith.constant 0 : index
      %c0_14 = arith.constant 0 : index
      %28 = vector.load %arg5[%c0_13, %c0_14] : memref<16x128xf32, #tpu.memory_space<vmem>>, vector<16x128xf32>
      tpu.vector_store %arg5[%c0_13, %c0_14], %27 {strides = array<i32>} : memref<16x128xf32, #tpu.memory_space<vmem>>, vector<16x128xf32>,
    } else {
    }
    %c0_i32_5 = arith.constant 0 : i32
    %11 = arith.cmpi eq, %arg1, %c0_i32_5 : i32
    %12 = arith.extui %11 : i1 to i32
    %c0_i32_6 = arith.constant 0 : i32
    %13 = arith.cmpi ne, %12, %c0_i32_6 : i32
    scf.if %13 {
      %c0 = arith.constant 0 : index
      %c0_7 = arith.constant 0 : index
      %14 = vector.load %arg5[%c0, %c0_7] : memref<16x128xf32, #tpu.memory_space<vmem>>, vector<16x128xf32>
      %15 = vector.shape_cast %14 : vector<16x128xf32> to vector<2x8x128xf32>
      %cst = arith.constant dense<0.000000e+00> : vector<8x128xf32>
      %16 = vector.multi_reduction <add>, %15, %cst [0] : vector<2x8x128xf32> to vector<8x128xf32>
      %c0_8 = arith.constant 0 : index
      %c0_9 = arith.constant 0 : index
      %17 = vector.load %arg4[%c0_8, %c0_9] : memref<8x128xf32, #tpu.memory_space<vmem>>, vector<8x128xf32>
      tpu.vector_store %arg4[%c0_8, %c0_9], %16 {strides = array<i32>} : memref<8x128xf32, #tpu.memory_space<vmem>>, vector<8x128xf32>,
    } else {
    }
    return
  }
  func.func @transform_0(%arg0: i32, %arg1: i32) -> (i32, i32) {
    %c1_i32 = arith.constant 1 : i32
    %0 = arith.muli %arg0, %c1_i32 : i32
    %1 = arith.addi %0, %arg1 : i32
    %c0_i32 = arith.constant 0 : i32
    %2 = arith.minsi %1, %c0_i32 : i32
    %c0_i32_0 = arith.constant 0 : i32
    %c0_i32_1 = arith.constant 0 : i32
    return %2, %c0_i32_0 : i32, i32
  }
  func.func @transform_1(%arg0: i32, %arg1: i32) -> (i32, i32) {
    %c1_i32 = arith.constant 1 : i32
    %0 = arith.muli %arg0, %c1_i32 : i32
    %1 = arith.addi %0, %arg1 : i32
    %c0_i32 = arith.constant 0 : i32
    %2 = arith.minsi %1, %c0_i32 : i32
    %c0_i32_0 = arith.constant 0 : i32
    %c0_i32_1 = arith.constant 0 : i32
    return %2, %c0_i32_0 : i32, i32
  }
  func.func @transform_2(%arg0: i32, %arg1: i32) -> (i32, i32) {
    %c0_i32 = arith.constant 0 : i32
    %c0_i32_0 = arith.constant 0 : i32
    return %arg0, %c0_i32 : i32, i32
  }
}

</mosaic_0001>

<llo_original>
// kernel: my_loss.1
$region0: #{my_loss.1}
  #allocation0 [shape = 'u32[]', space=smem, size = 0x4, offset = 0x4, fixed_abs, tag = 'smem constant byte address 0x4 - core index']
  #allocation1 [shape = 'u32[144,128]{1,0:T(1,128)}', space=vmem, size = 0x12000, scoped, tag = 'internal scratch']
  #allocation2 [shape = 'f32[16,128]{1,0:T(8,128)}', space=vmem, size = 0x2000, scoped, tag = 'scratch operand']
  %s0 = inlined_call_operand.vmem [shape: f32[16,128], index: 0, kind: input, shape index: {}]
  %s1 = inlined_call_operand.vmem [shape: f32[16,128], index: 1, kind: input, shape index: {}]
  %s2 = inlined_call_operand.vmem [shape: f32[8,128], index: 2, kind: output, shape index: {}]
  %s3 = sld [smem:[#allocation0]]
  $region34: #{my_loss.1} parent=0
    _
  %s5 = ssub.s32 1, %s3
  %s6 = scalar_select 0, %s5, %s3
  // Predicated region
  $region2: #{my_loss.1} parent=0 // pred_check
    _
  $region3: #{my_loss.1} parent=0 // pred_check_branch
    %8 = sbr.rel (0) target = $region5
  $region4: #{my_loss.1} parent=0 // pred_region
    %s9 = sadd.s32 0, 0
    %p10 = scmp.lt.s32.totalorder %s9, 0
    %s11 = scalar_select %p10, %s9, 0
    %s12 = smul.u32 2, %s11
    %p13 = scmp.lt.s32.totalorder %s12, 1
    %s14 = scalar_select %p13, %s12, 1
    %s15 = smul.addr %s14, 8
    %s16 = scalar_lea.vmem %s0, %s15
    %s17 = sadd.s32 0, 0
    %p18 = scmp.lt.s32.totalorder %s17, 0
    %s19 = scalar_select %p18, %s17, 0
    %s20 = smul.u32 2, %s19
  $region5: #{my_loss.1} parent=0 // pred_fallthru
    _
  // Predicated region
  $region6: #{my_loss.1} parent=0 // pred_check
    _
  $region7: #{my_loss.1} parent=0 // pred_check_branch
    %22 = sbr.rel (0) target = $region9
  $region8: #{my_loss.1} parent=0 // pred_region
    %s23 = sadd.s32 0, 0
    %p24 = scmp.lt.s32.totalorder %s23, 0
    %s25 = scalar_select %p24, %s23, 0
    %s26 = smul.u32 2, %s25
    %p27 = scmp.lt.s32.totalorder %s26, 1
    %s28 = scalar_select %p27, %s26, 1
    %s29 = smul.addr %s28, 8
    %s30 = scalar_lea.vmem %s1, %s29
    %s31 = sadd.s32 0, 0
    %p32 = scmp.lt.s32.totalorder %s31, 0
    %s33 = scalar_select %p32, %s31, 0
    %s34 = smul.u32 2, %s33
  $region9: #{my_loss.1} parent=0 // pred_fallthru
    _
  %s35 = sadd.s32 0, 0
  %p36 = scmp.lt.s32.totalorder %s35, 0
  %s37 = scalar_select %p36, %s35, 0
  %s38 = smul.u32 2, %s37
  %p39 = scmp.lt.s32.totalorder %s38, 1
  %s40 = scalar_select %p39, %s38, 1
  %s41 = smul.addr %s40, 8
  %s42 = scalar_lea.vmem %s0, %s41
  %s43 = sadd.s32 0, 0
  %p44 = scmp.lt.s32.totalorder %s43, 0
  %s45 = scalar_select %p44, %s43, 0
  %s46 = smul.u32 2, %s45
  %p47 = scmp.lt.s32.totalorder %s46, 1
  %s48 = scalar_select %p47, %s46, 1
  %s49 = smul.addr %s48, 8
  %s50 = scalar_lea.vmem %s1, %s49
  %s51 = sadd.s32 0, 0
  %p52 = scmp.lt.s32.totalorder %s51, 0
  %s53 = scalar_select %p52, %s51, 0
  %s54 = smul.u32 2, %s53
  %p55 = scmp.lt.s32.totalorder %s54, 1
  %s56 = scalar_select %p55, %s54, 1
  %s57 = smul.addr %s56, 8
  %s58 = scalar_lea.vmem %s0, %s57
  %s59 = sadd.s32 0, 0
  %p60 = scmp.lt.s32.totalorder %s59, 0
  %s61 = scalar_select %p60, %s59, 0
  %s62 = smul.u32 2, %s61
  %s63 = sadd.s32 0, 0
  %p64 = scmp.lt.s32.totalorder %s63, 0
  %s65 = scalar_select %p64, %s63, 0
  %s66 = smul.u32 2, %s65
  %p67 = scmp.lt.s32.totalorder %s66, 1
  %s68 = scalar_select %p67, %s66, 1
  %s69 = smul.addr %s68, 8
  %s70 = scalar_lea.vmem %s1, %s69
  %s71 = sadd.s32 0, 0
  %p72 = scmp.lt.s32.totalorder %s71, 0
  %s73 = scalar_select %p72, %s71, 0
  %s74 = smul.u32 2, %s73
  %p75 = scmp.eq.s32.totalorder 0, 0
  // Predicated region
  $region10: #{my_loss.1} parent=0 // pred_check
    %p76 = pneg %p75
  $region11: #{my_loss.1} parent=0 // pred_check_branch
    %78 = sbr.rel (%p76) target = $region13
  $region12: #{my_loss.1} parent=0 // pred_region
    %79 = vst [vmem:[#allocation2] sm:$0xff] 0.0
    %80 = vst [vmem:[#allocation2 + $0x8] sm:$0xff] 0.0
  $region13: #{my_loss.1} parent=0 // pred_fallthru
    _
  %s81 = sadd.s32 0, 0
  %p82 = scmp.lt.s32.totalorder %s81, 1
  // Predicated region
  $region14: #{my_loss.1} parent=0 // pred_check
    %p83 = pneg %p82
  $region15: #{my_loss.1} parent=0 // pred_check_branch
    %85 = sbr.rel (%p83) target = $region17
  $region16: #{my_loss.1} parent=0 // pred_region
    %v86 = vld [vmem:[#allocation2] sm:$0xff]
    %v87 = vld [vmem:[#allocation2 + $0x8] sm:$0xff]
    %v88 = vld [vmem:[%s70] sm:$0xff]
    %v89 = vld [vmem:[%s70 + $0x8] sm:$0xff]
    %v90 = vld [vmem:[%s58] sm:$0xff]
    %v91 = vld [vmem:[%s58 + $0x8] sm:$0xff]
    %v92 = vsub.f32 %v88, %v90
    %v93 = vsub.f32 %v89, %v91
    %v94 = vand.u32 2147483647, %v92
    %v95 = vand.u32 2147483647, %v93
    %v96 = vadd.f32 %v86, %v94
    %v97 = vadd.f32 %v87, %v95
    %98 = vst [vmem:[#allocation2] sm:$0xff] %v96
    %99 = vst [vmem:[#allocation2 + $0x8] sm:$0xff] %v97
  $region17: #{my_loss.1} parent=0 // pred_fallthru
    _
  %p100 = scmp.ge.s32.totalorder %s81, 1
  // Predicated region
  $region18: #{my_loss.1} parent=0 // pred_check
    %p101 = pneg %p100
  $region19: #{my_loss.1} parent=0 // pred_check_branch
    %103 = sbr.rel (%p101) target = $region21
  $region20: #{my_loss.1} parent=0 // pred_region
    %s104 = smul.u32 %s81, 16
    %v105 = vlaneseq
    %v106 = vshrl.u32 %v105, 7
    %v107 = vadd.s32 %v106, 8
    %v108 = vstv %s104
    %v109 = vadd.s32 %v108, %v106
    %v110 = vadd.s32 %v108, %v107
    %vm111 = vcmp.lt.s32.totalorder %v109, 16
    %vm112 = vcmp.lt.s32.totalorder %v110, 16
    %v113 = vld [vmem:[%s70] sm:$0xff]
    %v114 = vld [vmem:[%s70 + $0x8] sm:$0xff]
    %v115 = vld [vmem:[%s58] sm:$0xff]
    %v116 = vld [vmem:[%s58 + $0x8] sm:$0xff]
    %v117 = vsub.f32 %v113, %v115
    %v118 = vsub.f32 %v114, %v116
    %v119 = vand.u32 2147483647, %v117
    %v120 = vand.u32 2147483647, %v118
    %v121 = vld [vmem:[#allocation2] sm:$0xff]
    %v122 = vld [vmem:[#allocation2 + $0x8] sm:$0xff]
    %v123 = vsel %vm111, %v119, 0.0
    %v124 = vsel %vm112, %v120, 0.0
    %v125 = vadd.f32 %v121, %v123
    %v126 = vadd.f32 %v122, %v124
    %127 = vst [vmem:[#allocation2] sm:$0xff] %v125
    %128 = vst [vmem:[#allocation2 + $0x8] sm:$0xff] %v126
  $region21: #{my_loss.1} parent=0 // pred_fallthru
    _
  // Predicated region
  $region22: #{my_loss.1} parent=0 // pred_check
    %p129 = pneg %p75
  $region23: #{my_loss.1} parent=0 // pred_check_branch
    %131 = sbr.rel (%p129) target = $region25
  $region24: #{my_loss.1} parent=0 // pred_region
    %v132 = vld [vmem:[#allocation2] sm:$0xff]
    %v133 = vld [vmem:[#allocation2 + $0x8] sm:$0xff]
    %v134 = vadd.f32 %v132, %v133
    %135 = vst [vmem:[%s2] sm:$0xff] %v134
  $region25: #{my_loss.1} parent=0 // pred_fallthru
    _
  // Predicated region
  $region26: #{my_loss.1} parent=0 // pred_check
    _
  $region27: #{my_loss.1} parent=0 // pred_check_branch
    %137 = sbr.rel (0) target = $region29
  $region28: #{my_loss.1} parent=0 // pred_region
    _
  $region29: #{my_loss.1} parent=0 // pred_fallthru
    _
  // Predicated region
  $region30: #{my_loss.1} parent=0 // pred_check
    _
  $region31: #{my_loss.1} parent=0 // pred_check_branch
    %139 = sbr.rel (0) target = $region33
  $region32: #{my_loss.1} parent=0 // pred_region
    _
  $region33: #{my_loss.1} parent=0 // pred_fallthru
    _

</llo_original>
